<compile_context>
chip_gen: v7x
topology: tpu7x:2x2x1
jax: 0.10.0
libtpu: 0.0.40
codegen_flags: <defaults>
</compile_context>

<pallas_src>
import jax
import jax.numpy as jnp
from jax.experimental import pallas as pl
from jax.experimental.pallas import tpu as pltpu


LANE_COLS = 512          # lane width of the batch slab (multiple of 128)
VMEM_BUDGET = 8 << 20    # per-step VMEM budget, safe on v5e/v6e/v7x defaults


def _cdiv(a, b):
    return -(-a // b)


def _round_up(n, m):
    return ((n + m - 1) // m) * m


# ---------------------------------------------------------------------------
# Kernel
# ---------------------------------------------------------------------------
def _mlp_slab_kernel(x_ref, w1_ref, b1_ref, w2_ref, b2_ref, w3_ref, b3_ref,
                     o_ref):
    """One (tile_r, C) tile of the batch slab.

    x_ref : (in_features, tile_r, C)  dense batch slab (feature-major)
    w1_ref: (h1, in_features)         b1_ref: (h1, 1)
    w2_ref: (h2, h1) bf16 or f32      b2_ref: (h2, 1)
    w3_ref: (h2, 1)                   b3_ref: (1, 1)
    o_ref : (tile_r, C)
    """
    w1 = w1_ref[...]
    b1 = b1_ref[...]
    w2 = w2_ref[...]                 # already bf16 when use_bf16_mxu=True
    b2 = b2_ref[...]
    w3 = w3_ref[...]
    b3 = b3_ref[...]
    in_features = w1.shape[1]
    tile_r = o_ref.shape[0]
    mm_dtype = w2.dtype

    # Inner row loop: per-row (h, C) intermediates (a handful of vregs) keep
    # register/VMEM pressure flat no matter how large the grid tile is.
    @pl.loop(0, tile_r)
    def _row(r):
        row = pl.ds(r, 1)
        # fc1: K = in_features (== 2) is tiny -> VPU broadcast multiply-adds.
        acc = w1[:, 0:1] * x_ref[0, row, :]
        for k in range(1, in_features):           # static unroll
            acc = acc + w1[:, k:k + 1] * x_ref[k, row, :]
        h1 = jnp.maximum(acc + b1, 0.0)            # (h1, C) f32
        # fc2: the only real contraction (20x20) -> MXU, bf16 operands with
        # f32 accumulation.
        h2 = jnp.dot(w2, h1.astype(mm_dtype),
                     preferred_element_type=jnp.float32)
        h2 = jnp.maximum(h2 + b2, 0.0)             # (h2, C) f32
        # fc3: out_features == 1 -> VPU multiply + sublane (XLU) reduce.
        y = jnp.sum(w3 * h2, axis=0, keepdims=True) + b3   # (1, C)
        o_ref[row, :] = y.astype(o_ref.dtype)


# ---------------------------------------------------------------------------
# Tiling / wrappers
# ---------------------------------------------------------------------------
def _choose_tile_r(r_rows, in_features, out_features, c_cols,
                   vmem_budget_bytes=VMEM_BUDGET, min_grid_steps=4):
    """Rows of the slab per grid step.

    Big tiles amortise the ~0.35us per-step pipeline overhead; the
    min_grid_steps target keeps >= 4 steps when possible so the "parallel"
    batch axis can shard across both v7x TensorCores.  The budget covers the
    double-buffered x + out blocks and stays under the default scoped VMEM of
    every generation (16 MiB v5e, 32 MiB v6e/v7x); raise vmem_budget_bytes on
    v6e (128 MiB physical) for even fewer, bigger steps.
    """
    bytes_per_row = (in_features + out_features) * c_cols * 4   # f32 in + out
    fit = max(8, (vmem_budget_bytes // (2 * bytes_per_row)) // 8 * 8)
    target = max(8, _round_up(_cdiv(r_rows, min_grid_steps), 8))
    return min(fit, target)


def mlp_forward_slab(x_slab, w1, b1, w2, b2, w3, b3, *, tile_r=None,
                     use_bf16_mxu=True, vmem_budget_bytes=VMEM_BUDGET):
    """Forward pass on a pre-laid-out batch slab (the zero-copy fast path).

    x_slab: (in_features, R, C) float32, with R % 8 == 0 and C % 128 == 0.
    Weights/biases in PyTorch layout: w (out_dim, in_dim), b (out_dim, 1).
    Returns the (R, C) float32 output slab.
    """
    in_features, r_total, c_cols = x_slab.shape
    h1_dim = w1.shape[0]
    h2_dim = w2.shape[0]
    out_features = w3.shape[0]
    if out_features != 1:
        # The Model spec has out_features == 1; wider heads would need an
        # (out, R, C) output slab.
        raise NotImplementedError("slab kernel is specialised to out_features == 1")
    if r_total % 8 or c_cols % 128:
        raise ValueError("slab must have R % 8 == 0 and C % 128 == 0")

    if tile_r is None:
        tile_r = _choose_tile_r(r_total, in_features, out_features, c_cols,
                                vmem_budget_bytes)
        while r_total % tile_r:       # keep blocks dividing the slab
            tile_r -= 8
    if tile_r % 8 or r_total % tile_r:
        raise ValueError("tile_r must be a multiple of 8 that divides R")

    w2_mm = w2.astype(jnp.bfloat16) if use_bf16_mxu else w2   # cast once
    w3_t = w3.T                                               # (h2, 1), once

    grid = (r_total // tile_r,)

    def resident(shape):
        # Same block every grid step -> stays resident in VMEM (no re-DMA).
        return pl.BlockSpec(shape, lambda i: (0, 0))

    return pl.pallas_call(
        _mlp_slab_kernel,
        out_shape=jax.ShapeDtypeStruct((r_total, c_cols), jnp.float32),
        grid=grid,
        in_specs=[
            pl.BlockSpec((in_features, tile_r, c_cols), lambda i: (0, i, 0)),
            resident((h1_dim, in_features)),
            resident((h1_dim, 1)),
            resident((h2_dim, h1_dim)),
            resident((h2_dim, 1)),
            resident((h2_dim, out_features)),
            resident((out_features, 1)),
        ],
        out_specs=pl.BlockSpec((tile_r, c_cols), lambda i: (i, 0)),
        compiler_params=pltpu.CompilerParams(
            dimension_semantics=("parallel",)),   # shard rows across v7x TCs
    )(x_slab, w1, b1, w2_mm, b2, w3_t, b3)


def mlp_forward(x, w1, b1, w2, b2, w3, b3, *, use_bf16_mxu=True,
                lane_cols=LANE_COLS, vmem_budget_bytes=VMEM_BUDGET):
    """Forward pass from a PyTorch-style (N, in_features) batch.

    Packs the batch into the dense (in_features, R, C) slab once (a single
    transpose/pad op), runs the Pallas kernel, and trims back to (N, 1).
    For peak throughput build the slab upstream and call mlp_forward_slab
    directly, which has no wrapper-side layout ops at all.
    """
    n, in_features = x.shape
    out_features = w3.shape[0]
    c = lane_cols
    r_needed = max(1, _cdiv(n, c))
    tile_r = _choose_tile_r(r_needed, in_features, out_features, c,
                            vmem_budget_bytes)
    r_pad = _round_up(r_needed, tile_r)

    flat = jnp.zeros((in_features, r_pad * c), x.dtype).at[:, :n].set(x.T)
    x_slab = flat.reshape(in_features, r_pad, c)

    out_slab = mlp_forward_slab(x_slab, w1, b1, w2, b2, w3, b3,
                                tile_r=tile_r, use_bf16_mxu=use_bf16_mxu,
                                vmem_budget_bytes=vmem_budget_bytes)
    # Padded slab positions produce bias-propagated garbage; trim to N rows.
    return out_slab.reshape(-1)[:n].reshape(n, out_features)


# ---------------------------------------------------------------------------
# Params / reference
# ---------------------------------------------------------------------------
def init_params(key, in_features=2, h1=20, h2=20, out_features=1):
    """Mirrors nn.Linear's U(-1/sqrt(fan_in), 1/sqrt(fan_in)), PyTorch layout."""
    ks = jax.random.split(key, 6)

    def lin(kw, kb, fan_in, fan_out):
        bound = 1.0 / jnp.sqrt(jnp.float32(fan_in))
        w = jax.random.uniform(kw, (fan_out, fan_in), jnp.float32, -bound, bound)
        b = jax.random.uniform(kb, (fan_out, 1), jnp.float32, -bound, bound)
        return w, b

    w1, b1 = lin(ks[0], ks[1], in_features, h1)
    w2, b2 = lin(ks[2], ks[3], h1, h2)
    w3, b3 = lin(ks[4], ks[5], h2, out_features)
    return w1, b1, w2, b2, w3, b3


def reference_forward(x, w1, b1, w2, b2, w3, b3, *, use_bf16_mxu=True):
    """Pure-JAX reference.  When use_bf16_mxu, fc2 uses the same bf16-operand /
    f32-accumulate rounding as the kernel so tolerances can stay tight."""
    hi = jax.lax.Precision.HIGHEST
    h1 = jnp.maximum(jnp.dot(x, w1.T, precision=hi) + b1.T, 0.0)
    if use_bf16_mxu:
        z2 = jnp.dot(h1.astype(jnp.bfloat16), w2.T.astype(jnp.bfloat16),
                     preferred_element_type=jnp.float32)
    else:
        z2 = jnp.dot(h1, w2.T, precision=hi)
    h2 = jnp.maximum(z2 + b2.T, 0.0)
    return jnp.dot(h2, w3.T, precision=hi) + b3.T


if __name__ == "__main__":
    key = jax.random.PRNGKey(0)
    k_params, k_x1, k_x2 = jax.random.split(key, 3)

    in_features, h1, h2, out_features = 2, 20, 20, 1
    params = init_params(k_params, in_features, h1, h2, out_features)

    # (1) Tiny batch, exact-f32 path: single grid step, heavy slab padding.
    x_small = jax.random.normal(k_x1, (8, in_features), jnp.float32)
    y_small = mlp_forward(x_small, *params, use_bf16_mxu=False)
    jax.block_until_ready(y_small)
    assert y_small.shape == (8, out_features)
    assert jnp.allclose(
        y_small, reference_forward(x_small, *params, use_bf16_mxu=False),
        atol=1e-4, rtol=1e-4)

    # (2) Non-aligned batch, exact-f32 path: multi-step grid + padding/trim.
    x_big = jax.random.normal(k_x2, (12345, in_features), jnp.float32)
    y_big_f32 = mlp_forward(x_big, *params, use_bf16_mxu=False)
    jax.block_until_ready(y_big_f32)
    assert y_big_f32.shape == (12345, out_features)
    assert jnp.allclose(
        y_big_f32, reference_forward(x_big, *params, use_bf16_mxu=False),
        atol=1e-4, rtol=1e-4)

    # (3) bf16-MXU fast path vs a reference applying the same fc2 rounding
    #     (tolerance covers accumulation-order / bf16 tie-rounding differences).
    y_big_bf16 = mlp_forward(x_big, *params, use_bf16_mxu=True)
    jax.block_until_ready(y_big_bf16)
    assert y_big_bf16.shape == (12345, out_features)
    assert jnp.allclose(
        y_big_bf16, reference_forward(x_big, *params, use_bf16_mxu=True),
        atol=5e-3, rtol=5e-3)

    print("KERNEL_OK")
</pallas_src>

<mosaic_0001>
module attributes {stable_mosaic.version = 11 : i64} {
  func.func @_mlp_slab_kernel(%arg0: i32, %arg1: memref<2x8x512xf32, #tpu.memory_space<vmem>>, %arg2: memref<20x2xf32, #tpu.memory_space<vmem>>, %arg3: memref<20x1xf32, #tpu.memory_space<vmem>>, %arg4: memref<20x20xf32, #tpu.memory_space<vmem>>, %arg5: memref<20x1xf32, #tpu.memory_space<vmem>>, %arg6: memref<20x1xf32, #tpu.memory_space<vmem>>, %arg7: memref<1x1xf32, #tpu.memory_space<vmem>>, %arg8: memref<8x512xf32, #tpu.memory_space<vmem>>) attributes {dimension_semantics = [#tpu.dimension_semantics<parallel>], iteration_bounds = array<i64: 1>, scalar_prefetch = 0 : i64, scratch_operands = 0 : i64, tpu.core_type = #tpu.core_type<tc>, window_params = [{transform_indices = @transform_0, window_bounds = array<i64: 2, 8, 512>}, {pipeline_mode = #tpu.pipeline_mode<synchronous>, transform_indices = @transform_1, window_bounds = array<i64: 20, 2>}, {pipeline_mode = #tpu.pipeline_mode<synchronous>, transform_indices = @transform_2, window_bounds = array<i64: 20, 1>}, {pipeline_mode = #tpu.pipeline_mode<synchronous>, transform_indices = @transform_3, window_bounds = array<i64: 20, 20>}, {pipeline_mode = #tpu.pipeline_mode<synchronous>, transform_indices = @transform_4, window_bounds = array<i64: 20, 1>}, {pipeline_mode = #tpu.pipeline_mode<synchronous>, transform_indices = @transform_5, window_bounds = array<i64: 20, 1>}, {pipeline_mode = #tpu.pipeline_mode<synchronous>, transform_indices = @transform_6, window_bounds = array<i64: 1, 1>}, {transform_indices = @transform_7, window_bounds = array<i64: 8, 512>}]} {
    %c0 = arith.constant 0 : index
    %c0_0 = arith.constant 0 : index
    %0 = vector.load %arg2[%c0, %c0_0] : memref<20x2xf32, #tpu.memory_space<vmem>>, vector<20x2xf32>
    %c0_1 = arith.constant 0 : index
    %c0_2 = arith.constant 0 : index
    %1 = vector.load %arg3[%c0_1, %c0_2] : memref<20x1xf32, #tpu.memory_space<vmem>>, vector<20x1xf32>
    %c0_3 = arith.constant 0 : index
    %c0_4 = arith.constant 0 : index
    %2 = vector.load %arg4[%c0_3, %c0_4] : memref<20x20xf32, #tpu.memory_space<vmem>>, vector<20x20xf32>
    %c0_5 = arith.constant 0 : index
    %c0_6 = arith.constant 0 : index
    %3 = vector.load %arg5[%c0_5, %c0_6] : memref<20x1xf32, #tpu.memory_space<vmem>>, vector<20x1xf32>
    %c0_7 = arith.constant 0 : index
    %c0_8 = arith.constant 0 : index
    %4 = vector.load %arg6[%c0_7, %c0_8] : memref<20x1xf32, #tpu.memory_space<vmem>>, vector<20x1xf32>
    %c0_9 = arith.constant 0 : index
    %c0_10 = arith.constant 0 : index
    %5 = vector.load %arg7[%c0_9, %c0_10] : memref<1x1xf32, #tpu.memory_space<vmem>>, vector<1x1xf32>
    %c0_i32 = arith.constant 0 : i32
    %c8_i32 = arith.constant 8 : i32
    %6 = arith.addi %c0_i32, %c8_i32 : i32
    %c1_i32 = arith.constant 1 : i32
    scf.for %arg9 = %c0_i32 to %6 step %c1_i32  : i32 {
      %c1_i32_12 = arith.constant 1 : i32
      %7 = arith.muli %arg9, %c1_i32_12 : i32
      %c0_i32_13 = arith.constant 0 : i32
      %8 = arith.addi %c0_i32_13, %7 : i32
      %9 = vector.extract_strided_slice %0 {offsets = [0, 0], sizes = [20, 1], strides = [1, 1]} : vector<20x2xf32> to vector<20x1xf32>
      %c0_14 = arith.constant 0 : index
      %10 = arith.index_cast %8 : i32 to index
      %c0_15 = arith.constant 0 : index
      %11 = vector.load %arg1[%c0_14, %10, %c0_15] : memref<2x8x512xf32, #tpu.memory_space<vmem>>, vector<1x1x512xf32>
      %12 = vector.shape_cast %11 : vector<1x1x512xf32> to vector<1x512xf32>
      %13 = vector.broadcast %9 : vector<20x1xf32> to vector<20x512xf32>
      %14 = vector.broadcast %12 : vector<1x512xf32> to vector<20x512xf32>
      %15 = arith.mulf %13, %14 : vector<20x512xf32>
      %16 = vector.extract_strided_slice %0 {offsets = [0, 1], sizes = [20, 1], strides = [1, 1]} : vector<20x2xf32> to vector<20x1xf32>
      %c1 = arith.constant 1 : index
      %17 = arith.index_cast %8 : i32 to index
      %c0_16 = arith.constant 0 : index
      %18 = vector.load %arg1[%c1, %17, %c0_16] : memref<2x8x512xf32, #tpu.memory_space<vmem>>, vector<1x1x512xf32>
      %19 = vector.shape_cast %18 : vector<1x1x512xf32> to vector<1x512xf32>
      %20 = vector.broadcast %16 : vector<20x1xf32> to vector<20x512xf32>
      %21 = vector.broadcast %19 : vector<1x512xf32> to vector<20x512xf32>
      %22 = arith.mulf %20, %21 : vector<20x512xf32>
      %23 = arith.addf %15, %22 : vector<20x512xf32>
      %24 = vector.broadcast %1 : vector<20x1xf32> to vector<20x512xf32>
      %25 = arith.addf %23, %24 : vector<20x512xf32>
      %cst = arith.constant 0.000000e+00 : f32
      %26 = vector.broadcast %cst : f32 to vector<20x512xf32>
      %27 = arith.maximumf %25, %26 : vector<20x512xf32>
      %cst_17 = arith.constant dense<0.000000e+00> : vector<20x512xf32>
      %28 = tpu.matmul %2, %27, %cst_17 {dimension_numbers = #tpu.dot_dimension_numbers<[1], [0], [0], [1], [0, 0, 1, 1], [], []>} : vector<20x20xf32>, vector<20x512xf32>, vector<20x512xf32> -> vector<20x512xf32>
      %29 = vector.broadcast %3 : vector<20x1xf32> to vector<20x512xf32>
      %30 = arith.addf %28, %29 : vector<20x512xf32>
      %cst_18 = arith.constant 0.000000e+00 : f32
      %31 = vector.broadcast %cst_18 : f32 to vector<20x512xf32>
      %32 = arith.maximumf %30, %31 : vector<20x512xf32>
      %33 = vector.broadcast %4 : vector<20x1xf32> to vector<20x512xf32>
      %34 = arith.mulf %33, %32 : vector<20x512xf32>
      %cst_19 = arith.constant dense<0.000000e+00> : vector<512xf32>
      %35 = vector.multi_reduction <add>, %34, %cst_19 [0] : vector<20x512xf32> to vector<512xf32>
      %36 = vector.shape_cast %35 : vector<512xf32> to vector<1x512xf32>
      %37 = vector.broadcast %5 : vector<1x1xf32> to vector<1x512xf32>
      %38 = arith.addf %36, %37 : vector<1x512xf32>
      %39 = arith.index_cast %8 : i32 to index
      %c0_20 = arith.constant 0 : index
      %40 = vector.load %arg8[%39, %c0_20] : memref<8x512xf32, #tpu.memory_space<vmem>>, vector<1x512xf32>
      tpu.vector_store %arg8[%39, %c0_20], %38 {strides = array<i32>} : memref<8x512xf32, #tpu.memory_space<vmem>>, vector<1x512xf32>,
    }
    %c8_i32_11 = arith.constant 8 : i32
    return
  }
  func.func @transform_0(%arg0: i32) -> (i32, i32, i32) {
    %c0_i32 = arith.constant 0 : i32
    %c0_i32_0 = arith.constant 0 : i32
    %c0_i32_1 = arith.constant 0 : i32
    return %c0_i32, %arg0, %c0_i32_0 : i32, i32, i32
  }
  func.func @transform_1(%arg0: i32) -> (i32, i32) {
    %c0_i32 = arith.constant 0 : i32
    %c0_i32_0 = arith.constant 0 : i32
    %c0_i32_1 = arith.constant 0 : i32
    return %c0_i32, %c0_i32_0 : i32, i32
  }
  func.func @transform_2(%arg0: i32) -> (i32, i32) {
    %c0_i32 = arith.constant 0 : i32
    %c0_i32_0 = arith.constant 0 : i32
    %c0_i32_1 = arith.constant 0 : i32
    return %c0_i32, %c0_i32_0 : i32, i32
  }
  func.func @transform_3(%arg0: i32) -> (i32, i32) {
    %c0_i32 = arith.constant 0 : i32
    %c0_i32_0 = arith.constant 0 : i32
    %c0_i32_1 = arith.constant 0 : i32
    return %c0_i32, %c0_i32_0 : i32, i32
  }
  func.func @transform_4(%arg0: i32) -> (i32, i32) {
    %c0_i32 = arith.constant 0 : i32
    %c0_i32_0 = arith.constant 0 : i32
    %c0_i32_1 = arith.constant 0 : i32
    return %c0_i32, %c0_i32_0 : i32, i32
  }
  func.func @transform_5(%arg0: i32) -> (i32, i32) {
    %c0_i32 = arith.constant 0 : i32
    %c0_i32_0 = arith.constant 0 : i32
    %c0_i32_1 = arith.constant 0 : i32
    return %c0_i32, %c0_i32_0 : i32, i32
  }
  func.func @transform_6(%arg0: i32) -> (i32, i32) {
    %c0_i32 = arith.constant 0 : i32
    %c0_i32_0 = arith.constant 0 : i32
    %c0_i32_1 = arith.constant 0 : i32
    return %c0_i32, %c0_i32_0 : i32, i32
  }
  func.func @transform_7(%arg0: i32) -> (i32, i32) {
    %c0_i32 = arith.constant 0 : i32
    %c0_i32_0 = arith.constant 0 : i32
    return %arg0, %c0_i32 : i32, i32
  }
}

</mosaic_0001>

<llo_original>
// kernel: tpu_custom_call.1
$region0: #{tpu_custom_call.1}
  #allocation0 [shape = 'u32[]', space=smem, size = 0x4, offset = 0x4, fixed_abs, tag = 'smem constant byte address 0x4 - core index']
  #allocation1 [shape = 'u32[144,128]{1,0:T(1,128)}', space=vmem, size = 0x12000, scoped, tag = 'internal scratch']
  #allocation2 [shape = 'f32[1,1]{1,0:T(1,128)S(1)}', space=vmem, size = 0x200, scoped, tag = 'scoped memory for tpu_custom_call.1']
  %s0 = inlined_call_operand.vmem [shape: f32[2,8,512], index: 0, kind: input, shape index: {}]
  %s1 = inlined_call_operand.vmem [shape: f32[20,2], index: 1, kind: input, shape index: {}]
  %s2 = inlined_call_operand.vmem [shape: f32[20,1], index: 2, kind: input, shape index: {}]
  %s3 = inlined_call_operand.vmem [shape: f32[20,20], index: 3, kind: input, shape index: {}]
  %s4 = inlined_call_operand.vmem [shape: f32[20,1], index: 4, kind: input, shape index: {}]
  %s5 = inlined_call_operand.vmem [shape: f32[20,1], index: 5, kind: input, shape index: {}]
  %s6 = inlined_call_operand.<no memory space> [shape: f32[1,1], index: 6, kind: input, shape index: {}]
  %s7 = inlined_call_operand.hbm [shape: f32[8,512], index: 7, kind: output, shape index: {}]
  %s8 = sld [smem:[#allocation0]]
  $region45: #{tpu_custom_call.1} parent=0
    _
  %s10 = ssub.s32 1, %s8
  %s11 = scalar_select 0, %s10, %s8
  %v12 = vstv %s6
  %13 = vst [vmem:[#allocation2] sm:$0x1] %v12
  $region1: #{tpu_custom_call.1} parent=0
    #allocation3 [shape = 'u8[16384]{0}', space=vmem, size = 0x4000, scoped, tag = 'output window, operand 0, single buffered']
    #allocation4 [shape = 's32[1]{0}', space=sflag, size = 0x4, scoped, tag = 'scoped memory for tpu_custom_call.1']
    %14 = vsyncpa [#allocation4], 0
    // Predicated region
    $region2: #{tpu_custom_call.1} parent=1 // pred_check
      _
    $region3: #{tpu_custom_call.1} parent=1 // pred_check_branch
      %16 = sbr.rel (0) target = $region5
    $region4: #{tpu_custom_call.1} parent=1 // pred_region
      _
    $region5: #{tpu_custom_call.1} parent=1 // pred_fallthru
      _
    // Predicated region
    $region6: #{tpu_custom_call.1} parent=1 // pred_check
      _
    $region7: #{tpu_custom_call.1} parent=1 // pred_check_branch
      %18 = sbr.rel (0) target = $region9
    $region8: #{tpu_custom_call.1} parent=1 // pred_region
      _
    $region9: #{tpu_custom_call.1} parent=1 // pred_fallthru
      _
    // Predicated region
    $region10: #{tpu_custom_call.1} parent=1 // pred_check
      _
    $region11: #{tpu_custom_call.1} parent=1 // pred_check_branch
      %20 = sbr.rel (0) target = $region13
    $region12: #{tpu_custom_call.1} parent=1 // pred_region
      _
    $region13: #{tpu_custom_call.1} parent=1 // pred_fallthru
      _
    // Predicated region
    $region14: #{tpu_custom_call.1} parent=1 // pred_check
      _
    $region15: #{tpu_custom_call.1} parent=1 // pred_check_branch
      %22 = sbr.rel (0) target = $region17
    $region16: #{tpu_custom_call.1} parent=1 // pred_region
      _
    $region17: #{tpu_custom_call.1} parent=1 // pred_fallthru
      _
    // Predicated region
    $region18: #{tpu_custom_call.1} parent=1 // pred_check
      _
    $region19: #{tpu_custom_call.1} parent=1 // pred_check_branch
      %24 = sbr.rel (0) target = $region21
    $region20: #{tpu_custom_call.1} parent=1 // pred_region
      _
    $region21: #{tpu_custom_call.1} parent=1 // pred_fallthru
      _
    // Predicated region
    $region22: #{tpu_custom_call.1} parent=1 // pred_check
      _
    $region23: #{tpu_custom_call.1} parent=1 // pred_check_branch
      %26 = sbr.rel (0) target = $region25
    $region24: #{tpu_custom_call.1} parent=1 // pred_region
      _
    $region25: #{tpu_custom_call.1} parent=1 // pred_fallthru
      _
    // Predicated region
    $region26: #{tpu_custom_call.1} parent=1 // pred_check
      _
    $region27: #{tpu_custom_call.1} parent=1 // pred_check_branch
      %28 = sbr.rel (0) target = $region29
    $region28: #{tpu_custom_call.1} parent=1 // pred_region
      _
    $region29: #{tpu_custom_call.1} parent=1 // pred_fallthru
      _
    %v29 = vld [vmem:[%s1] sm:$0xff]
    %v30 = vld [vmem:[%s1 + $0x8] sm:$0xff]
    %v31 = vld [vmem:[%s1 + $0x10] sm:$0xf]
    %v32 = vld [vmem:[%s2] sm:$0xff]
    %v33 = vld [vmem:[%s2 + $0x8] sm:$0xff]
    %v34 = vld [vmem:[%s2 + $0x10] sm:$0xf]
    %v35 = vld [vmem:[%s3] sm:$0xff]
    %v36 = vld [vmem:[%s3 + $0x8] sm:$0xff]
    %v37 = vld [vmem:[%s3 + $0x10] sm:$0xf]
    %v38 = vld [vmem:[%s4] sm:$0xff]
    %v39 = vld [vmem:[%s4 + $0x8] sm:$0xff]
    %v40 = vld [vmem:[%s4 + $0x10] sm:$0xf]
    %v41 = vld [vmem:[%s5] sm:$0xff]
    %v42 = vld [vmem:[%s5 + $0x8] sm:$0xff]
    %v43 = vld [vmem:[%s5 + $0x10] sm:$0xf]
    %v44 = vld [vmem:[#allocation2] sm:$0x1]
    loop: start=0, step=1, limit=8
    $region30: #{tpu_custom_call.1} parent=1 // loop_pre_header
      _
    $region31: #{tpu_custom_call.1} parent=1 // loop_header
      %s46 = sphi 0, %s50
      %p47 = scmp.ge.s32.totalorder %s46, 8
    $region32: #{tpu_custom_call.1} parent=1 // loop_header_branch
      %49 = sbr.rel (%p47) target = $region36
    $region33: #{tpu_custom_call.1} parent=1 // loop_body
      %s51 = sshra.s32 %s46, 3
      %s52 = sand.u32 %s46, 7
      %s53 = sshra.s32 %s46, 3
      %s54 = sand.u32 %s46, 7
      %s55 = smul.u32 %s51, 4
      %s56 = smul.u32 %s55, 8
      %s57 = sadd.s32 %s56, %s54
      %s58 = scalar_lea.vmem %s0, %s57
      %v59 = vld [vmem:[%s58] ss:$8 sm:$0xf]
      %61 = vset.pattern.permute.xlu0 0
      %62 = vperm.xlu0 %61, %v29
      %v63 = vpop.permute.xlu0 %62
      %66 = vset.pattern.permute.xlu0 0
      %67 = vperm.xlu0 %66, %v30
      %v68 = vpop.permute.xlu0 %67
      %71 = vset.pattern.permute.xlu0 0
      %72 = vperm.xlu0 %71, %v31
      %v73 = vpop.permute.xlu0 %72
      %v76 = vlaneseq
      %v77 = vshrl.u32 %v76, 7
      %v78 = vsub.s32 0, %v77
      %v79 = vrot.slane %v59, %v78
      %v80 = vlaneseq
      %v81 = vshrl.u32 %v80, 7
      %v82 = vsub.s32 1, %v81
      %v83 = vrot.slane %v59, %v82
      %v84 = vlaneseq
      %v85 = vshrl.u32 %v84, 7
      %v86 = vsub.s32 2, %v85
      %v87 = vrot.slane %v59, %v86
      %v88 = vlaneseq
      %v89 = vshrl.u32 %v88, 7
      %v90 = vsub.s32 3, %v89
      %v91 = vrot.slane %v59, %v90
      %v96 = vmul.f32 %v63, %v79
      %v97 = vmul.f32 %v63, %v83
      %v98 = vmul.f32 %v63, %v87
      %v99 = vmul.f32 %v63, %v91
      %v100 = vmul.f32 %v68, %v79
      %v101 = vmul.f32 %v68, %v83
      %v102 = vmul.f32 %v68, %v87
      %v103 = vmul.f32 %v68, %v91
      %v104 = vmul.f32 %v73, %v79
      %v105 = vmul.f32 %v73, %v83
      %v106 = vmul.f32 %v73, %v87
      %v107 = vmul.f32 %v73, %v91
      %s108 = sadd.s32 32, %s57
      %s109 = scalar_lea.vmem %s0, %s108
      %v110 = vld [vmem:[%s109] ss:$8 sm:$0xf]
      %111 = vset.pattern.permute.xlu0 1
      %112 = vperm.xlu0 %111, %v29
      %v113 = vpop.permute.xlu0 %112
      %115 = vset.pattern.permute.xlu0 1
      %116 = vperm.xlu0 %115, %v30
      %v117 = vpop.permute.xlu0 %116
      %119 = vset.pattern.permute.xlu0 1
      %120 = vperm.xlu0 %119, %v31
      %v121 = vpop.permute.xlu0 %120
      %v124 = vlaneseq
      %v125 = vshrl.u32 %v124, 7
      %v126 = vsub.s32 0, %v125
      %v127 = vrot.slane %v110, %v126
      %v128 = vlaneseq
      %v129 = vshrl.u32 %v128, 7
      %v130 = vsub.s32 1, %v129
      %v131 = vrot.slane %v110, %v130
      %v132 = vlaneseq
      %v133 = vshrl.u32 %v132, 7
      %v134 = vsub.s32 2, %v133
      %v135 = vrot.slane %v110, %v134
      %v136 = vlaneseq
      %v137 = vshrl.u32 %v136, 7
      %v138 = vsub.s32 3, %v137
      %v139 = vrot.slane %v110, %v138
      %v144 = vmul.f32 %v113, %v127
      %v145 = vmul.f32 %v113, %v131
      %v146 = vmul.f32 %v113, %v135
      %v147 = vmul.f32 %v113, %v139
      %v148 = vmul.f32 %v117, %v127
      %v149 = vmul.f32 %v117, %v131
      %v150 = vmul.f32 %v117, %v135
      %v151 = vmul.f32 %v117, %v139
      %v152 = vmul.f32 %v121, %v127
      %v153 = vmul.f32 %v121, %v131
      %v154 = vmul.f32 %v121, %v135
      %v155 = vmul.f32 %v121, %v139
      %v156 = vadd.f32 %v96, %v144
      %v157 = vadd.f32 %v97, %v145
      %v158 = vadd.f32 %v98, %v146
      %v159 = vadd.f32 %v99, %v147
      %v160 = vadd.f32 %v100, %v148
      %v161 = vadd.f32 %v101, %v149
      %v162 = vadd.f32 %v102, %v150
      %v163 = vadd.f32 %v103, %v151
      %v164 = vadd.f32 %v104, %v152
      %v165 = vadd.f32 %v105, %v153
      %v166 = vadd.f32 %v106, %v154
      %v167 = vadd.f32 %v107, %v155
      %169 = vset.pattern.permute.xlu0 0
      %170 = vperm.xlu0 %169, %v32
      %v171 = vpop.permute.xlu0 %170
      %174 = vset.pattern.permute.xlu0 0
      %175 = vperm.xlu0 %174, %v33
      %v176 = vpop.permute.xlu0 %175
      %179 = vset.pattern.permute.xlu0 0
      %180 = vperm.xlu0 %179, %v34
      %v181 = vpop.permute.xlu0 %180
      %v183 = vadd.f32 %v156, %v171
      %v184 = vadd.f32 %v157, %v171
      %v185 = vadd.f32 %v158, %v171
      %v186 = vadd.f32 %v159, %v171
      %v187 = vadd.f32 %v160, %v176
      %v188 = vadd.f32 %v161, %v176
      %v189 = vadd.f32 %v162, %v176
      %v190 = vadd.f32 %v163, %v176
      %v191 = vadd.f32 %v164, %v181
      %v192 = vadd.f32 %v165, %v181
      %v193 = vadd.f32 %v166, %v181
      %v194 = vadd.f32 %v167, %v181
      %v195 = vmax.f32 %v183, 0.0
      %v196 = vmax.f32 %v184, 0.0
      %v197 = vmax.f32 %v185, 0.0
      %v198 = vmax.f32 %v186, 0.0
      %v199 = vmax.f32 %v187, 0.0
      %v200 = vmax.f32 %v188, 0.0
      %v201 = vmax.f32 %v189, 0.0
      %v202 = vmax.f32 %v190, 0.0
      %v203 = vmax.f32 %v191, 0.0
      %v204 = vmax.f32 %v192, 0.0
      %v205 = vmax.f32 %v193, 0.0
      %v206 = vmax.f32 %v194, 0.0
      %208 = vset.pattern.permute.xlu0 0
      %209 = vperm.xlu0 %208, %v38
      %v210 = vpop.permute.xlu0 %209
      %213 = vset.pattern.permute.xlu0 0
      %214 = vperm.xlu0 %213, %v39
      %v215 = vpop.permute.xlu0 %214
      %218 = vset.pattern.permute.xlu0 0
      %219 = vperm.xlu0 %218, %v40
      %v220 = vpop.permute.xlu0 %219
      %vm222 = vcmask 162816
      %v224 = vsel %vm222, %v35, 0
      %v227 = vsel %vm222, %v36, 0
      %v230 = vsel %vm222, %v37, 0
      %vm232 = vcmask 1043456
      %v234 = vsel %vm232, %v203, 0
      %v237 = vsel %vm232, %v204, 0
      %v240 = vsel %vm232, %v205, 0
      %v243 = vsel %vm232, %v206, 0
      %245 = vmatprep.subr.mxu0 %v196
      %246 = vmatpush1.msra.mxu0 %v195
      %247 = vmatprep.subr.mxu0 %v200
      %248 = vmatpush1.msra.mxu0 %v199
      %249 = vmatprep.subr.mxu0 %v237
      %250 = vmatpush1.msra.mxu0 %v234
      %251 = vmatprep.subr.mxu0 0.0
      %252 = vmatpush1.msra.mxu0 0.0
      %253 = vmatprep.subr.mxu0 0.0
      %254 = vmatpush1.msra.mxu0 0.0
      %255 = vmatprep.subr.mxu0 0.0
      %256 = vmatpush1.msra.mxu0 0.0
      %257 = vmatprep.subr.mxu0 0.0
      %258 = vmatpush1.msra.mxu0 0.0
      %259 = vmatprep.subr.mxu0 0.0
      %260 = vmatpush1.msra.mxu0 0.0
      %261 = vmatprep.subr.mxu0 0.0
      %262 = vmatpush1.msra.mxu0 0.0
      %263 = vmatprep.subr.mxu0 0.0
      %264 = vmatpush1.msra.mxu0 0.0
      %265 = vmatprep.subr.mxu0 0.0
      %266 = vmatpush1.msra.mxu0 0.0
      %267 = vmatprep.subr.mxu0 0.0
      %268 = vmatpush1.msra.mxu0 0.0
      %269 = vmatprep.subr.mxu0 0.0
      %270 = vmatpush1.msra.mxu0 0.0
      %271 = vmatprep.subr.mxu0 0.0
      %272 = vmatpush1.msra.mxu0 0.0
      %273 = vmatprep.subr.mxu0 0.0
      %274 = vmatpush1.msra.mxu0 0.0
      %275 = vmatprep.subr.mxu0 0.0
      %276 = vmatpush1.msra.mxu0 0.0
      %277 = vmatprep.subr.mxu0 0.0
      %278 = vmatpush1.msra.mxu0 0.0
      %279 = vmatprep.subr.mxu0 0.0
      %280 = vmatpush1.msra.mxu0 0.0
      %281 = vmatprep.subr.mxu0 0.0
      %282 = vmatpush1.msra.mxu0 0.0
      %283 = vmatprep.subr.mxu0 0.0
      %284 = vmatpush1.msra.mxu0 0.0
      %285 = vmatprep.subr.mxu0 0.0
      %286 = vmatpush1.msra.mxu0 0.0
      %287 = vmatprep.subr.mxu0 0.0
      %288 = vmatpush1.msra.mxu0 0.0
      %289 = vmatprep.subr.mxu0 0.0
      %290 = vmatpush1.msra.mxu0 0.0
      %291 = vmatprep.subr.mxu0 0.0
      %292 = vmatpush1.msra.mxu0 0.0
      %293 = vmatprep.subr.mxu0 0.0
      %294 = vmatpush1.msra.mxu0 0.0
      %295 = vmatprep.subr.mxu0 0.0
      %296 = vmatpush1.msra.mxu0 0.0
      %297 = vmatprep.subr.mxu0 0.0
      %298 = vmatpush1.msra.mxu0 0.0
      %299 = vmatprep.subr.mxu0 0.0
      %300 = vmatpush1.msra.mxu0 0.0
      %301 = vmatprep.subr.mxu0 0.0
      %302 = vmatpush1.msra.mxu0 0.0
      %303 = vmatprep.subr.mxu0 0.0
      %304 = vmatpush1.msra.mxu0 0.0
      %305 = vmatprep.subr.mxu0 0.0
      %306 = vmatpush1.msra.mxu0 0.0
      %307 = vmatprep.subr.mxu0 0.0
      %308 = vmatpush1.msra.mxu0 0.0
      %309 = vmatprep.mubr.f32.mxu0 0.0
      %310 = vmatmul.mubr.f32.gmra.mrb[0].mxu0 %v224
      %v311 = vpop.f32.mrb[0].mxu0
      %v312 = vadd.f32 %v210, %v311
      %v313 = vpop.f32.mrb[0].mxu0
      %v314 = vadd.f32 %v210, %v313
      %315 = vmatprep.mubr.f32.mxu0 0.0
      %316 = vmatmul.mubr.f32.gmra.mrb[0].mxu0 %v227
      %v317 = vpop.f32.mrb[0].mxu0
      %v318 = vadd.f32 %v215, %v317
      %v319 = vpop.f32.mrb[0].mxu0
      %v320 = vadd.f32 %v215, %v319
      %321 = vmatprep.mubr.f32.mxu0 0.0
      %322 = vmatmul.mubr.f32.gmra.mrb[0].mxu0 %v230
      %v323 = vpop.f32.mrb[0].mxu0
      %v324 = vadd.f32 %v220, %v323
      %v325 = vpop.f32.mrb[0].mxu0
      %v326 = vadd.f32 %v220, %v325
      %327 = vdwg.mxu0
      %328 = vmatprep.subr.mxu0 %v198
      %329 = vmatpush1.msra.mxu0 %v197
      %330 = vmatprep.subr.mxu0 %v202
      %331 = vmatpush1.msra.mxu0 %v201
      %332 = vmatprep.subr.mxu0 %v243
      %333 = vmatpush1.msra.mxu0 %v240
      %334 = vmatprep.subr.mxu0 0.0
      %335 = vmatpush1.msra.mxu0 0.0
      %336 = vmatprep.subr.mxu0 0.0
      %337 = vmatpush1.msra.mxu0 0.0
      %338 = vmatprep.subr.mxu0 0.0
      %339 = vmatpush1.msra.mxu0 0.0
      %340 = vmatprep.subr.mxu0 0.0
      %341 = vmatpush1.msra.mxu0 0.0
      %342 = vmatprep.subr.mxu0 0.0
      %343 = vmatpush1.msra.mxu0 0.0
      %344 = vmatprep.subr.mxu0 0.0
      %345 = vmatpush1.msra.mxu0 0.0
      %346 = vmatprep.subr.mxu0 0.0
      %347 = vmatpush1.msra.mxu0 0.0
      %348 = vmatprep.subr.mxu0 0.0
      %349 = vmatpush1.msra.mxu0 0.0
      %350 = vmatprep.subr.mxu0 0.0
      %351 = vmatpush1.msra.mxu0 0.0
      %352 = vmatprep.subr.mxu0 0.0
      %353 = vmatpush1.msra.mxu0 0.0
      %354 = vmatprep.subr.mxu0 0.0
      %355 = vmatpush1.msra.mxu0 0.0
      %356 = vmatprep.subr.mxu0 0.0
      %357 = vmatpush1.msra.mxu0 0.0
      %358 = vmatprep.subr.mxu0 0.0
      %359 = vmatpush1.msra.mxu0 0.0
      %360 = vmatprep.subr.mxu0 0.0
      %361 = vmatpush1.msra.mxu0 0.0
      %362 = vmatprep.subr.mxu0 0.0
      %363 = vmatpush1.msra.mxu0 0.0
      %364 = vmatprep.subr.mxu0 0.0
      %365 = vmatpush1.msra.mxu0 0.0
      %366 = vmatprep.subr.mxu0 0.0
      %367 = vmatpush1.msra.mxu0 0.0
      %368 = vmatprep.subr.mxu0 0.0
      %369 = vmatpush1.msra.mxu0 0.0
      %370 = vmatprep.subr.mxu0 0.0
      %371 = vmatpush1.msra.mxu0 0.0
      %372 = vmatprep.subr.mxu0 0.0
      %373 = vmatpush1.msra.mxu0 0.0
      %374 = vmatprep.subr.mxu0 0.0
      %375 = vmatpush1.msra.mxu0 0.0
      %376 = vmatprep.subr.mxu0 0.0
      %377 = vmatpush1.msra.mxu0 0.0
      %378 = vmatprep.subr.mxu0 0.0
      %379 = vmatpush1.msra.mxu0 0.0
      %380 = vmatprep.subr.mxu0 0.0
      %381 = vmatpush1.msra.mxu0 0.0
      %382 = vmatprep.subr.mxu0 0.0
      %383 = vmatpush1.msra.mxu0 0.0
      %384 = vmatprep.subr.mxu0 0.0
      %385 = vmatpush1.msra.mxu0 0.0
      %386 = vmatprep.subr.mxu0 0.0
      %387 = vmatpush1.msra.mxu0 0.0
      %388 = vmatprep.subr.mxu0 0.0
      %389 = vmatpush1.msra.mxu0 0.0
      %390 = vmatprep.subr.mxu0 0.0
      %391 = vmatpush1.msra.mxu0 0.0
      %392 = vmatprep.mubr.f32.mxu0 0.0
      %393 = vmatmul.mubr.f32.gmra.mrb[0].mxu0 %v224
      %v394 = vpop.f32.mrb[0].mxu0
      %v395 = vadd.f32 %v210, %v394
      %v396 = vpop.f32.mrb[0].mxu0
      %v397 = vadd.f32 %v210, %v396
      %398 = vmatprep.mubr.f32.mxu0 0.0
      %399 = vmatmul.mubr.f32.gmra.mrb[0].mxu0 %v227
      %v400 = vpop.f32.mrb[0].mxu0
      %v401 = vadd.f32 %v215, %v400
      %v402 = vpop.f32.mrb[0].mxu0
      %v403 = vadd.f32 %v215, %v402
      %404 = vmatprep.mubr.f32.mxu0 0.0
      %405 = vmatmul.mubr.f32.gmra.mrb[0].mxu0 %v230
      %v406 = vpop.f32.mrb[0].mxu0
      %v407 = vadd.f32 %v220, %v406
      %v408 = vpop.f32.mrb[0].mxu0
      %v409 = vadd.f32 %v220, %v408
      %410 = vdwg.mxu0
      %v411 = vmax.f32 %v312, 0.0
      %v412 = vmax.f32 %v314, 0.0
      %v413 = vmax.f32 %v395, 0.0
      %v414 = vmax.f32 %v397, 0.0
      %v415 = vmax.f32 %v318, 0.0
      %v416 = vmax.f32 %v320, 0.0
      %v417 = vmax.f32 %v401, 0.0
      %v418 = vmax.f32 %v403, 0.0
      %v419 = vmax.f32 %v324, 0.0
      %v420 = vmax.f32 %v326, 0.0
      %v421 = vmax.f32 %v407, 0.0
      %v422 = vmax.f32 %v409, 0.0
      %424 = vset.pattern.permute.xlu0 0
      %425 = vperm.xlu0 %424, %v41
      %v426 = vpop.permute.xlu0 %425
      %429 = vset.pattern.permute.xlu0 0
      %430 = vperm.xlu0 %429, %v42
      %v431 = vpop.permute.xlu0 %430
      %434 = vset.pattern.permute.xlu0 0
      %435 = vperm.xlu0 %434, %v43
      %v436 = vpop.permute.xlu0 %435
      %v438 = vmul.f32 %v426, %v411
      %v439 = vmul.f32 %v426, %v412
      %v440 = vmul.f32 %v426, %v413
      %v441 = vmul.f32 %v426, %v414
      %v442 = vmul.f32 %v431, %v415
      %v443 = vmul.f32 %v431, %v416
      %v444 = vmul.f32 %v431, %v417
      %v445 = vmul.f32 %v431, %v418
      %v446 = vmul.f32 %v436, %v419
      %v447 = vmul.f32 %v436, %v420
      %v448 = vmul.f32 %v436, %v421
      %v449 = vmul.f32 %v436, %v422
      %v450 = vadd.f32 %v438, %v442
      %v451 = vsel %vm232, %v446, 0.0
      %v452 = vadd.f32 %v450, %v451
      %v453 = vrot.slane %v452, 4
      %v454 = vadd.f32 %v452, %v453
      %v455 = vrot.slane %v454, 2
      %v456 = vadd.f32 %v454, %v455
      %v457 = vrot.slane %v456, 1
      %v458 = vadd.f32 %v456, %v457
      %v459 = vadd.f32 %v439, %v443
      %v460 = vsel %vm232, %v447, 0.0
      %v461 = vadd.f32 %v459, %v460
      %v462 = vrot.slane %v461, 4
      %v463 = vadd.f32 %v461, %v462
      %v464 = vrot.slane %v463, 2
      %v465 = vadd.f32 %v463, %v464
      %v466 = vrot.slane %v465, 1
      %v467 = vadd.f32 %v465, %v466
      %v468 = vadd.f32 %v440, %v444
      %v469 = vsel %vm232, %v448, 0.0
      %v470 = vadd.f32 %v468, %v469
      %v471 = vrot.slane %v470, 4
      %v472 = vadd.f32 %v470, %v471
      %v473 = vrot.slane %v472, 2
      %v474 = vadd.f32 %v472, %v473
      %v475 = vrot.slane %v474, 1
      %v476 = vadd.f32 %v474, %v475
      %v477 = vadd.f32 %v441, %v445
      %v478 = vsel %vm232, %v449, 0.0
      %v479 = vadd.f32 %v477, %v478
      %v480 = vrot.slane %v479, 4
      %v481 = vadd.f32 %v479, %v480
      %v482 = vrot.slane %v481, 2
      %v483 = vadd.f32 %v481, %v482
      %v484 = vrot.slane %v483, 1
      %v485 = vadd.f32 %v483, %v484
      %487 = vset.pattern.permute.xlu0 0
      %488 = vperm.xlu0 %487, %v44
      %v489 = vpop.permute.xlu0 %488
      %v491 = vlaneseq
      %v492 = vshrl.u32 %v491, 7
      %v493 = vsub.s32 0, %v492
      %v494 = vrot.slane %v489, %v493
      %v495 = vadd.f32 %v458, %v494
      %v496 = vadd.f32 %v467, %v494
      %v497 = vadd.f32 %v476, %v494
      %v498 = vadd.f32 %v485, %v494
      %v503 = vcombine.low %v495, %v496
      %v504 = vcombine.low %v497, %v498
      %v506 = vunpack.c.l.s4 1966171168
      %v507 = vunpack.c.0.s8 %v506
      %v508 = vlaneseq
      %v509 = vshrl.u32 %v508, 7
      %v510 = vsub.s32 %v507, %v509
      %v511 = vrot.slane %v503, %v510
      %v513 = vunpack.c.l.s4 1966171168
      %v514 = vunpack.c.0.s8 %v513
      %v515 = vlaneseq
      %v516 = vshrl.u32 %v515, 7
      %v517 = vsub.s32 %v514, %v516
      %v518 = vrot.slane %v504, %v517
      %v519 = vcombine.low %v511, %v518
      %v521 = vunpack.c.l.s4 1966171168
      %v522 = vunpack.c.0.s8 %v521
      %v523 = vlaneseq
      %v524 = vshrl.u32 %v523, 7
      %v525 = vsub.s32 %v522, %v524
      %v526 = vrot.slane %v519, %v525
      %v528 = vlaneseq
      %vm529 = vcmp.ge.s32.totalorder %v528, 0
      %vm530 = vcmp.lt.s32.totalorder %v528, 512
      %vm531 = vmand %vm529, %vm530
      %s532 = scalar_lea.vmem [#allocation3], %s57
      %533 = vst.msk [vmem:[%s532] ss:$8 sm:$0xf] %vm531, %v526
      %534 = vst.msk [vmem:[%s532] ss:$8 sm:$0x0] %vm531, %v526
    $region34: #{tpu_custom_call.1} parent=1 // loop_footer
      %s50 = sadd.s32 1, %s46
    $region35: #{tpu_custom_call.1} parent=1 // loop_footer_branch
      %45 = sbr.rel target = $region31
    $region36: #{tpu_custom_call.1} parent=1 // loop_exit
      _
    // Predicated region
    $region37: #{tpu_custom_call.1} parent=1 // pred_check
      _
    $region38: #{tpu_custom_call.1} parent=1 // pred_check_branch
      %536 = sbr.rel (0) target = $region40
    $region39: #{tpu_custom_call.1} parent=1 // pred_region
      %s538 = ssub.s32 512, 512
      %539 = vsyncadd [#allocation4], %s538
      %s541 = sshll.u32 [#allocation3], 4
      %s542 = int_to_ptr.vmem [resolvable:$true] %s541
      %544 = dma.vmem_to_hbm [thread:$0]  %s542, 512, %s7, [#allocation4]
    $region40: #{tpu_custom_call.1} parent=1 // pred_fallthru
      _
    // Predicated region
    $region41: #{tpu_custom_call.1} parent=1 // pred_check
      _
    $region42: #{tpu_custom_call.1} parent=1 // pred_check_branch
      %546 = sbr.rel (0) target = $region44
    $region43: #{tpu_custom_call.1} parent=1 // pred_region
      %547 = dma.done [#allocation4], 512
    $region44: #{tpu_custom_call.1} parent=1 // pred_fallthru
      _
    %548 = vsyncpa [#allocation4], 1

</llo_original>
